<compile_context>
chip_gen: v7x
topology: tpu7x:2x2x1
jax: 0.10.0
libtpu: 0.0.40
codegen_flags: <defaults>
</compile_context>

<pallas_src>
import jax
import jax.numpy as jnp
from jax.experimental import pallas as pl
from jax.experimental.pallas import tpu as pltpu


def _round_up(n: int, m: int) -> int:
    return ((n + m - 1) // m) * m


def _make_policy_kernel(act_dims: int):
    def kernel(x_ref, w1_ref, b1_ref, w2_ref, b2_ref, o_ref):
        # fc1 + relu: (hidden, obs) @ (obs, TB) -> (hidden, TB)
        h = jnp.dot(w1_ref[...], x_ref[...], preferred_element_type=jnp.float32)
        h = jnp.maximum(h + b1_ref[...], 0.0)
        # fc2: (act_dims, hidden) @ (hidden, TB) -> (act_dims, TB)
        logits = jnp.dot(w2_ref[...], h, preferred_element_type=jnp.float32)
        logits = logits + b2_ref[...]

        if act_dims == 2:
            # 2-class softmax == sigmoid of the logit difference:
            #   p0 = 1 / (1 + exp(l1 - l0)),  p1 = 1 - p0
            # No XLU reductions; one EUP exp + one EUP approx reciprocal.
            d = logits[1:2, :] - logits[0:1, :]
            p0 = pl.reciprocal(1.0 + jnp.exp(d), approx=True)
            o_ref[0:1, :] = p0.astype(o_ref.dtype)
            o_ref[1:2, :] = (1.0 - p0).astype(o_ref.dtype)
        else:
            # General numerically-stable softmax over the (small) action axis.
            m = jnp.max(logits, axis=0, keepdims=True)
            e = jnp.exp(logits - m)
            denom = jnp.sum(e, axis=0, keepdims=True)
            o_ref[...] = (e * pl.reciprocal(denom, approx=True)).astype(o_ref.dtype)

    return kernel


def policy_net_forward(x, w1, b1, w2, b2, *, batch_tile=512):
    """Forward pass of policy_net.

    x : (B, obs_dims) float32
    w1: (hidden, obs_dims)   -- PyTorch fc1.weight layout (out, in)
    b1: (hidden,)
    w2: (act_dims, hidden)   -- PyTorch fc2.weight layout (out, in)
    b2: (act_dims,)
    returns: (B, act_dims) action probabilities (softmax over the last dim)
    """
    B, obs_dims = x.shape
    hidden = w1.shape[0]
    act_dims = w2.shape[0]

    # Lane-dense batch tiling: the lane dim of each tile must be a multiple
    # of 128.  TB*(obs+hidden+act)*4B double-buffered stays far under the
    # scoped VMEM default on all of v5e/v6e/v7x for TB <= 2048.
    tb = min(_round_up(batch_tile, 128), _round_up(B, 128))
    b_pad = _round_up(B, tb)

    # Batch on lanes: (obs_dims, B_pad).  Zero-padded columns are computed and
    # discarded; they cannot produce NaN/Inf.
    x_t = jnp.zeros((obs_dims, b_pad), x.dtype).at[:, :B].set(x.T)

    b1_2d = b1.reshape(hidden, 1)
    b2_2d = b2.reshape(act_dims, 1)

    out_t = pl.pallas_call(
        _make_policy_kernel(act_dims),
        out_shape=jax.ShapeDtypeStruct((act_dims, b_pad), jnp.float32),
        grid=(b_pad // tb,),
        in_specs=[
            pl.BlockSpec((obs_dims, tb), lambda i: (0, i)),      # x tile (pipelined)
            pl.BlockSpec((hidden, obs_dims), lambda i: (0, 0)),  # W1, VMEM-resident
            pl.BlockSpec((hidden, 1), lambda i: (0, 0)),         # b1, VMEM-resident
            pl.BlockSpec((act_dims, hidden), lambda i: (0, 0)),  # W2, VMEM-resident
            pl.BlockSpec((act_dims, 1), lambda i: (0, 0)),       # b2, VMEM-resident
        ],
        out_specs=pl.BlockSpec((act_dims, tb), lambda i: (0, i)),
        compiler_params=pltpu.CompilerParams(
            dimension_semantics=("parallel",)),  # v7x: shard batch over both TCs
    )(x_t, w1, b1_2d, w2, b2_2d)

    # Layout plumbing only: drop padding, put batch back on the leading axis.
    return out_t[:, :B].T


def init_params(key, obs_dims, hidden, act_dims):
    """PyTorch nn.Linear default init: U[-1/sqrt(fan_in), +1/sqrt(fan_in)]."""
    k1, k2, k3, k4 = jax.random.split(key, 4)
    bound1 = 1.0 / jnp.sqrt(obs_dims)
    bound2 = 1.0 / jnp.sqrt(hidden)
    w1 = jax.random.uniform(k1, (hidden, obs_dims), jnp.float32, -bound1, bound1)
    b1 = jax.random.uniform(k2, (hidden,), jnp.float32, -bound1, bound1)
    w2 = jax.random.uniform(k3, (act_dims, hidden), jnp.float32, -bound2, bound2)
    b2 = jax.random.uniform(k4, (act_dims,), jnp.float32, -bound2, bound2)
    return w1, b1, w2, b2


if __name__ == "__main__":
    # CartPole-v1: obs_dims=4, act_dims=2; hidden=32 per the module.
    obs_dims, hidden, act_dims = 4, 32, 2
    batch = 8

    key = jax.random.PRNGKey(0)
    k_params, k_x = jax.random.split(key)
    w1, b1, w2, b2 = init_params(k_params, obs_dims, hidden, act_dims)
    x = jax.random.normal(k_x, (batch, obs_dims), jnp.float32)

    out = policy_net_forward(x, w1, b1, w2, b2)
    out = jax.block_until_ready(out)

    # Plain-JAX reference (same math as the torch module).
    h_ref = jnp.maximum(x @ w1.T + b1, 0.0)
    logits_ref = h_ref @ w2.T + b2
    ref = jax.nn.softmax(logits_ref, axis=-1)

    assert out.shape == (batch, act_dims)
    # Tolerance covers the EUP approx reciprocal used in the kernel softmax.
    assert jnp.allclose(out, ref, atol=2e-3, rtol=2e-3), float(jnp.max(jnp.abs(out - ref)))
    assert jnp.allclose(jnp.sum(out, axis=-1), 1.0, atol=1e-5)

    print("KERNEL_OK")
</pallas_src>

<mosaic_0001>
module attributes {stable_mosaic.version = 11 : i64} {
  func.func @kernel(%arg0: i32, %arg1: memref<4x128xf32, #tpu.memory_space<vmem>>, %arg2: memref<32x4xf32, #tpu.memory_space<vmem>>, %arg3: memref<32x1xf32, #tpu.memory_space<vmem>>, %arg4: memref<2x32xf32, #tpu.memory_space<vmem>>, %arg5: memref<2x1xf32, #tpu.memory_space<vmem>>, %arg6: memref<2x128xf32, #tpu.memory_space<vmem>>) attributes {dimension_semantics = [#tpu.dimension_semantics<parallel>], iteration_bounds = array<i64: 1>, scalar_prefetch = 0 : i64, scratch_operands = 0 : i64, tpu.core_type = #tpu.core_type<tc>, window_params = [{transform_indices = @transform_0, window_bounds = array<i64: 4, 128>}, {pipeline_mode = #tpu.pipeline_mode<synchronous>, transform_indices = @transform_1, window_bounds = array<i64: 32, 4>}, {pipeline_mode = #tpu.pipeline_mode<synchronous>, transform_indices = @transform_2, window_bounds = array<i64: 32, 1>}, {pipeline_mode = #tpu.pipeline_mode<synchronous>, transform_indices = @transform_3, window_bounds = array<i64: 2, 32>}, {pipeline_mode = #tpu.pipeline_mode<synchronous>, transform_indices = @transform_4, window_bounds = array<i64: 2, 1>}, {transform_indices = @transform_5, window_bounds = array<i64: 2, 128>}]} {
    %c0 = arith.constant 0 : index
    %c0_0 = arith.constant 0 : index
    %0 = vector.load %arg2[%c0, %c0_0] : memref<32x4xf32, #tpu.memory_space<vmem>>, vector<32x4xf32>
    %c0_1 = arith.constant 0 : index
    %c0_2 = arith.constant 0 : index
    %1 = vector.load %arg1[%c0_1, %c0_2] : memref<4x128xf32, #tpu.memory_space<vmem>>, vector<4x128xf32>
    %cst = arith.constant dense<0.000000e+00> : vector<32x128xf32>
    %2 = tpu.matmul %0, %1, %cst {dimension_numbers = #tpu.dot_dimension_numbers<[1], [0], [0], [1], [0, 0, 1, 1], [], []>} : vector<32x4xf32>, vector<4x128xf32>, vector<32x128xf32> -> vector<32x128xf32>
    %c0_3 = arith.constant 0 : index
    %c0_4 = arith.constant 0 : index
    %3 = vector.load %arg3[%c0_3, %c0_4] : memref<32x1xf32, #tpu.memory_space<vmem>>, vector<32x1xf32>
    %4 = vector.broadcast %3 : vector<32x1xf32> to vector<32x128xf32>
    %5 = arith.addf %2, %4 : vector<32x128xf32>
    %cst_5 = arith.constant 0.000000e+00 : f32
    %6 = vector.broadcast %cst_5 : f32 to vector<32x128xf32>
    %7 = arith.maximumf %5, %6 : vector<32x128xf32>
    %c0_6 = arith.constant 0 : index
    %c0_7 = arith.constant 0 : index
    %8 = vector.load %arg4[%c0_6, %c0_7] : memref<2x32xf32, #tpu.memory_space<vmem>>, vector<2x32xf32>
    %cst_8 = arith.constant dense<0.000000e+00> : vector<2x128xf32>
    %9 = tpu.matmul %8, %7, %cst_8 {dimension_numbers = #tpu.dot_dimension_numbers<[1], [0], [0], [1], [0, 0, 1, 1], [], []>} : vector<2x32xf32>, vector<32x128xf32>, vector<2x128xf32> -> vector<2x128xf32>
    %c0_9 = arith.constant 0 : index
    %c0_10 = arith.constant 0 : index
    %10 = vector.load %arg5[%c0_9, %c0_10] : memref<2x1xf32, #tpu.memory_space<vmem>>, vector<2x1xf32>
    %11 = vector.broadcast %10 : vector<2x1xf32> to vector<2x128xf32>
    %12 = arith.addf %9, %11 : vector<2x128xf32>
    %13 = vector.extract_strided_slice %12 {offsets = [1, 0], sizes = [1, 128], strides = [1, 1]} : vector<2x128xf32> to vector<1x128xf32>
    %14 = vector.extract_strided_slice %12 {offsets = [0, 0], sizes = [1, 128], strides = [1, 1]} : vector<2x128xf32> to vector<1x128xf32>
    %15 = arith.subf %13, %14 : vector<1x128xf32>
    %16 = math.exp %15 : vector<1x128xf32>
    %cst_11 = arith.constant 1.000000e+00 : f32
    %17 = vector.broadcast %cst_11 : f32 to vector<1x128xf32>
    %18 = arith.addf %17, %16 : vector<1x128xf32>
    %19 = tpu.reciprocal %18 {approx = true} : vector<1x128xf32> -> vector<1x128xf32>
    %c0_12 = arith.constant 0 : index
    %c0_13 = arith.constant 0 : index
    %20 = vector.load %arg6[%c0_12, %c0_13] : memref<2x128xf32, #tpu.memory_space<vmem>>, vector<1x128xf32>
    tpu.vector_store %arg6[%c0_12, %c0_13], %19 {strides = array<i32>} : memref<2x128xf32, #tpu.memory_space<vmem>>, vector<1x128xf32>,
    %cst_14 = arith.constant 1.000000e+00 : f32
    %21 = vector.broadcast %cst_14 : f32 to vector<1x128xf32>
    %22 = arith.subf %21, %19 : vector<1x128xf32>
    %c1 = arith.constant 1 : index
    %c0_15 = arith.constant 0 : index
    %23 = vector.load %arg6[%c1, %c0_15] : memref<2x128xf32, #tpu.memory_space<vmem>>, vector<1x128xf32>
    tpu.vector_store %arg6[%c1, %c0_15], %22 {strides = array<i32>} : memref<2x128xf32, #tpu.memory_space<vmem>>, vector<1x128xf32>,
    return
  }
  func.func @transform_0(%arg0: i32) -> (i32, i32) {
    %c0_i32 = arith.constant 0 : i32
    %c0_i32_0 = arith.constant 0 : i32
    return %c0_i32, %arg0 : i32, i32
  }
  func.func @transform_1(%arg0: i32) -> (i32, i32) {
    %c0_i32 = arith.constant 0 : i32
    %c0_i32_0 = arith.constant 0 : i32
    %c0_i32_1 = arith.constant 0 : i32
    return %c0_i32, %c0_i32_0 : i32, i32
  }
  func.func @transform_2(%arg0: i32) -> (i32, i32) {
    %c0_i32 = arith.constant 0 : i32
    %c0_i32_0 = arith.constant 0 : i32
    %c0_i32_1 = arith.constant 0 : i32
    return %c0_i32, %c0_i32_0 : i32, i32
  }
  func.func @transform_3(%arg0: i32) -> (i32, i32) {
    %c0_i32 = arith.constant 0 : i32
    %c0_i32_0 = arith.constant 0 : i32
    %c0_i32_1 = arith.constant 0 : i32
    return %c0_i32, %c0_i32_0 : i32, i32
  }
  func.func @transform_4(%arg0: i32) -> (i32, i32) {
    %c0_i32 = arith.constant 0 : i32
    %c0_i32_0 = arith.constant 0 : i32
    %c0_i32_1 = arith.constant 0 : i32
    return %c0_i32, %c0_i32_0 : i32, i32
  }
  func.func @transform_5(%arg0: i32) -> (i32, i32) {
    %c0_i32 = arith.constant 0 : i32
    %c0_i32_0 = arith.constant 0 : i32
    return %c0_i32, %arg0 : i32, i32
  }
}

</mosaic_0001>

<llo_original>
// kernel: tpu_custom_call.1
$region0: #{tpu_custom_call.1}
  #allocation0 [shape = 'u32[]', space=smem, size = 0x4, offset = 0x4, fixed_abs, tag = 'smem constant byte address 0x4 - core index']
  #allocation1 [shape = 'u32[144,128]{1,0:T(1,128)}', space=vmem, size = 0x12000, scoped, tag = 'internal scratch']
  %s0 = inlined_call_operand.vmem [shape: f32[4,128], index: 0, kind: input, shape index: {}]
  %s1 = inlined_call_operand.vmem [shape: f32[32,4], index: 1, kind: input, shape index: {}]
  %s2 = inlined_call_operand.vmem [shape: f32[32,1], index: 2, kind: input, shape index: {}]
  %s3 = inlined_call_operand.vmem [shape: f32[2,32], index: 3, kind: input, shape index: {}]
  %s4 = inlined_call_operand.vmem [shape: f32[2,1], index: 4, kind: input, shape index: {}]
  %s5 = inlined_call_operand.hbm [shape: f32[2,128], index: 5, kind: output, shape index: {}]
  %s6 = sld [smem:[#allocation0]]
  $region30: #{tpu_custom_call.1} parent=0
    _
  %s8 = ssub.s32 1, %s6
  %s9 = scalar_select 0, %s8, %s6
  $region1: #{tpu_custom_call.1} parent=0
    #allocation2 [shape = 'u8[1024]{0}', space=vmem, size = 0x400, scoped, tag = 'output window, operand 0, single buffered']
    #allocation3 [shape = 's32[1]{0}', space=sflag, size = 0x4, scoped, tag = 'scoped memory for tpu_custom_call.1']
    %10 = vsyncpa [#allocation3], 0
    // Predicated region
    $region2: #{tpu_custom_call.1} parent=1 // pred_check
      _
    $region3: #{tpu_custom_call.1} parent=1 // pred_check_branch
      %12 = sbr.rel (0) target = $region5
    $region4: #{tpu_custom_call.1} parent=1 // pred_region
      _
    $region5: #{tpu_custom_call.1} parent=1 // pred_fallthru
      _
    // Predicated region
    $region6: #{tpu_custom_call.1} parent=1 // pred_check
      _
    $region7: #{tpu_custom_call.1} parent=1 // pred_check_branch
      %14 = sbr.rel (0) target = $region9
    $region8: #{tpu_custom_call.1} parent=1 // pred_region
      _
    $region9: #{tpu_custom_call.1} parent=1 // pred_fallthru
      _
    // Predicated region
    $region10: #{tpu_custom_call.1} parent=1 // pred_check
      _
    $region11: #{tpu_custom_call.1} parent=1 // pred_check_branch
      %16 = sbr.rel (0) target = $region13
    $region12: #{tpu_custom_call.1} parent=1 // pred_region
      _
    $region13: #{tpu_custom_call.1} parent=1 // pred_fallthru
      _
    // Predicated region
    $region14: #{tpu_custom_call.1} parent=1 // pred_check
      _
    $region15: #{tpu_custom_call.1} parent=1 // pred_check_branch
      %18 = sbr.rel (0) target = $region17
    $region16: #{tpu_custom_call.1} parent=1 // pred_region
      _
    $region17: #{tpu_custom_call.1} parent=1 // pred_fallthru
      _
    // Predicated region
    $region18: #{tpu_custom_call.1} parent=1 // pred_check
      _
    $region19: #{tpu_custom_call.1} parent=1 // pred_check_branch
      %20 = sbr.rel (0) target = $region21
    $region20: #{tpu_custom_call.1} parent=1 // pred_region
      _
    $region21: #{tpu_custom_call.1} parent=1 // pred_fallthru
      _
    %v21 = vld [vmem:[%s1] sm:$0xff]
    %v22 = vld [vmem:[%s1 + $0x8] sm:$0xff]
    %v23 = vld [vmem:[%s1 + $0x10] sm:$0xff]
    %v24 = vld [vmem:[%s1 + $0x18] sm:$0xff]
    %v25 = vld [vmem:[%s0] sm:$0xf]
    %v26 = vld [vmem:[%s2] sm:$0xff]
    %v27 = vld [vmem:[%s2 + $0x8] sm:$0xff]
    %v28 = vld [vmem:[%s2 + $0x10] sm:$0xff]
    %v29 = vld [vmem:[%s2 + $0x18] sm:$0xff]
    %31 = vset.pattern.permute.xlu0 0
    %32 = vperm.xlu0 %31, %v26
    %v33 = vpop.permute.xlu0 %32
    %36 = vset.pattern.permute.xlu0 0
    %37 = vperm.xlu0 %36, %v27
    %v38 = vpop.permute.xlu0 %37
    %41 = vset.pattern.permute.xlu0 0
    %42 = vperm.xlu0 %41, %v28
    %v43 = vpop.permute.xlu0 %42
    %46 = vset.pattern.permute.xlu0 0
    %47 = vperm.xlu0 %46, %v29
    %v48 = vpop.permute.xlu0 %47
    %vm50 = vcmask 31744
    %v52 = vsel %vm50, %v21, 0
    %v55 = vsel %vm50, %v22, 0
    %v58 = vsel %vm50, %v23, 0
    %v61 = vsel %vm50, %v24, 0
    %vm63 = vcmask 1043456
    %v65 = vsel %vm63, %v25, 0
    %67 = vmatprep.subr.mxu0 0.0
    %68 = vmatpush1.msra.mxu0 %v65
    %69 = vmatprep.subr.mxu0 0.0
    %70 = vmatpush1.msra.mxu0 0.0
    %71 = vmatprep.subr.mxu0 0.0
    %72 = vmatpush1.msra.mxu0 0.0
    %73 = vmatprep.subr.mxu0 0.0
    %74 = vmatpush1.msra.mxu0 0.0
    %75 = vmatprep.subr.mxu0 0.0
    %76 = vmatpush1.msra.mxu0 0.0
    %77 = vmatprep.subr.mxu0 0.0
    %78 = vmatpush1.msra.mxu0 0.0
    %79 = vmatprep.subr.mxu0 0.0
    %80 = vmatpush1.msra.mxu0 0.0
    %81 = vmatprep.subr.mxu0 0.0
    %82 = vmatpush1.msra.mxu0 0.0
    %83 = vmatprep.subr.mxu0 0.0
    %84 = vmatpush1.msra.mxu0 0.0
    %85 = vmatprep.subr.mxu0 0.0
    %86 = vmatpush1.msra.mxu0 0.0
    %87 = vmatprep.subr.mxu0 0.0
    %88 = vmatpush1.msra.mxu0 0.0
    %89 = vmatprep.subr.mxu0 0.0
    %90 = vmatpush1.msra.mxu0 0.0
    %91 = vmatprep.subr.mxu0 0.0
    %92 = vmatpush1.msra.mxu0 0.0
    %93 = vmatprep.subr.mxu0 0.0
    %94 = vmatpush1.msra.mxu0 0.0
    %95 = vmatprep.subr.mxu0 0.0
    %96 = vmatpush1.msra.mxu0 0.0
    %97 = vmatprep.subr.mxu0 0.0
    %98 = vmatpush1.msra.mxu0 0.0
    %99 = vmatprep.subr.mxu0 0.0
    %100 = vmatpush1.msra.mxu0 0.0
    %101 = vmatprep.subr.mxu0 0.0
    %102 = vmatpush1.msra.mxu0 0.0
    %103 = vmatprep.subr.mxu0 0.0
    %104 = vmatpush1.msra.mxu0 0.0
    %105 = vmatprep.subr.mxu0 0.0
    %106 = vmatpush1.msra.mxu0 0.0
    %107 = vmatprep.subr.mxu0 0.0
    %108 = vmatpush1.msra.mxu0 0.0
    %109 = vmatprep.subr.mxu0 0.0
    %110 = vmatpush1.msra.mxu0 0.0
    %111 = vmatprep.subr.mxu0 0.0
    %112 = vmatpush1.msra.mxu0 0.0
    %113 = vmatprep.subr.mxu0 0.0
    %114 = vmatpush1.msra.mxu0 0.0
    %115 = vmatprep.subr.mxu0 0.0
    %116 = vmatpush1.msra.mxu0 0.0
    %117 = vmatprep.subr.mxu0 0.0
    %118 = vmatpush1.msra.mxu0 0.0
    %119 = vmatprep.subr.mxu0 0.0
    %120 = vmatpush1.msra.mxu0 0.0
    %121 = vmatprep.subr.mxu0 0.0
    %122 = vmatpush1.msra.mxu0 0.0
    %123 = vmatprep.subr.mxu0 0.0
    %124 = vmatpush1.msra.mxu0 0.0
    %125 = vmatprep.subr.mxu0 0.0
    %126 = vmatpush1.msra.mxu0 0.0
    %127 = vmatprep.subr.mxu0 0.0
    %128 = vmatpush1.msra.mxu0 0.0
    %129 = vmatprep.subr.mxu0 0.0
    %130 = vmatpush1.msra.mxu0 0.0
    %131 = vmatprep.mubr.f32.mxu0 0.0
    %132 = vmatmul.mubr.f32.gmra.mrb[0].mxu0 %v52
    %v133 = vpop.f32.mrb[0].mxu0
    %v134 = vadd.f32 %v33, %v133
    %v135 = vpop.f32.mrb[0].mxu0
    %136 = vmatprep.mubr.f32.mxu0 0.0
    %137 = vmatmul.mubr.f32.gmra.mrb[0].mxu0 %v55
    %v138 = vpop.f32.mrb[0].mxu0
    %v139 = vadd.f32 %v38, %v138
    %v140 = vpop.f32.mrb[0].mxu0
    %141 = vmatprep.mubr.f32.mxu0 0.0
    %142 = vmatmul.mubr.f32.gmra.mrb[0].mxu0 %v58
    %v143 = vpop.f32.mrb[0].mxu0
    %v144 = vadd.f32 %v43, %v143
    %v145 = vpop.f32.mrb[0].mxu0
    %146 = vmatprep.mubr.f32.mxu0 0.0
    %147 = vmatmul.mubr.f32.gmra.mrb[0].mxu0 %v61
    %v148 = vpop.f32.mrb[0].mxu0
    %v149 = vadd.f32 %v48, %v148
    %v150 = vpop.f32.mrb[0].mxu0
    %151 = vdwg.mxu0
    %v152 = vmax.f32 %v134, 0.0
    %v153 = vmax.f32 %v139, 0.0
    %v154 = vmax.f32 %v144, 0.0
    %v155 = vmax.f32 %v149, 0.0
    %v156 = vld [vmem:[%s3] sm:$0x3]
    %v157 = vld [vmem:[%s4] sm:$0x3]
    %159 = vset.pattern.permute.xlu0 0
    %160 = vperm.xlu0 %159, %v157
    %v161 = vpop.permute.xlu0 %160
    %vm163 = vcmask 261120
    %v165 = vsel %vm163, %v156, 0
    %167 = vmatprep.subr.mxu0 0.0
    %168 = vmatpush1.msra.mxu0 %v152
    %169 = vmatprep.subr.mxu0 0.0
    %170 = vmatpush1.msra.mxu0 %v153
    %171 = vmatprep.subr.mxu0 0.0
    %172 = vmatpush1.msra.mxu0 %v154
    %173 = vmatprep.subr.mxu0 0.0
    %174 = vmatpush1.msra.mxu0 %v155
    %175 = vmatprep.subr.mxu0 0.0
    %176 = vmatpush1.msra.mxu0 0.0
    %177 = vmatprep.subr.mxu0 0.0
    %178 = vmatpush1.msra.mxu0 0.0
    %179 = vmatprep.subr.mxu0 0.0
    %180 = vmatpush1.msra.mxu0 0.0
    %181 = vmatprep.subr.mxu0 0.0
    %182 = vmatpush1.msra.mxu0 0.0
    %183 = vmatprep.subr.mxu0 0.0
    %184 = vmatpush1.msra.mxu0 0.0
    %185 = vmatprep.subr.mxu0 0.0
    %186 = vmatpush1.msra.mxu0 0.0
    %187 = vmatprep.subr.mxu0 0.0
    %188 = vmatpush1.msra.mxu0 0.0
    %189 = vmatprep.subr.mxu0 0.0
    %190 = vmatpush1.msra.mxu0 0.0
    %191 = vmatprep.subr.mxu0 0.0
    %192 = vmatpush1.msra.mxu0 0.0
    %193 = vmatprep.subr.mxu0 0.0
    %194 = vmatpush1.msra.mxu0 0.0
    %195 = vmatprep.subr.mxu0 0.0
    %196 = vmatpush1.msra.mxu0 0.0
    %197 = vmatprep.subr.mxu0 0.0
    %198 = vmatpush1.msra.mxu0 0.0
    %199 = vmatprep.subr.mxu0 0.0
    %200 = vmatpush1.msra.mxu0 0.0
    %201 = vmatprep.subr.mxu0 0.0
    %202 = vmatpush1.msra.mxu0 0.0
    %203 = vmatprep.subr.mxu0 0.0
    %204 = vmatpush1.msra.mxu0 0.0
    %205 = vmatprep.subr.mxu0 0.0
    %206 = vmatpush1.msra.mxu0 0.0
    %207 = vmatprep.subr.mxu0 0.0
    %208 = vmatpush1.msra.mxu0 0.0
    %209 = vmatprep.subr.mxu0 0.0
    %210 = vmatpush1.msra.mxu0 0.0
    %211 = vmatprep.subr.mxu0 0.0
    %212 = vmatpush1.msra.mxu0 0.0
    %213 = vmatprep.subr.mxu0 0.0
    %214 = vmatpush1.msra.mxu0 0.0
    %215 = vmatprep.subr.mxu0 0.0
    %216 = vmatpush1.msra.mxu0 0.0
    %217 = vmatprep.subr.mxu0 0.0
    %218 = vmatpush1.msra.mxu0 0.0
    %219 = vmatprep.subr.mxu0 0.0
    %220 = vmatpush1.msra.mxu0 0.0
    %221 = vmatprep.subr.mxu0 0.0
    %222 = vmatpush1.msra.mxu0 0.0
    %223 = vmatprep.subr.mxu0 0.0
    %224 = vmatpush1.msra.mxu0 0.0
    %225 = vmatprep.subr.mxu0 0.0
    %226 = vmatpush1.msra.mxu0 0.0
    %227 = vmatprep.subr.mxu0 0.0
    %228 = vmatpush1.msra.mxu0 0.0
    %229 = vmatprep.subr.mxu0 0.0
    %230 = vmatpush1.msra.mxu0 0.0
    %231 = vmatprep.mubr.f32.mxu0 0.0
    %232 = vmatmul.mubr.f32.gmra.mrb[0].mxu0 %v165
    %v233 = vpop.f32.mrb[0].mxu0
    %v234 = vadd.f32 %v161, %v233
    %v235 = vpop.f32.mrb[0].mxu0
    %236 = vdwg.mxu0
    %v238 = vrot.slane %v234, 7
    %v240 = vsub.f32 %v234, %v238
    %v241 = vmul.f32 %v240, 1.442695
    %v242 = vpow.pop %v241
    %v243 = vadd.f32 %v242, 1.0
    %v244 = vrcp.pop %v243
    %245 = vst [vmem:[#allocation2 - $0x1] sm:$0x2] %v244
    %v246 = vsub.f32 1.0, %v244
    %247 = vst [vmem:[#allocation2] sm:$0x2] %v246
    // Predicated region
    $region22: #{tpu_custom_call.1} parent=1 // pred_check
      _
    $region23: #{tpu_custom_call.1} parent=1 // pred_check_branch
      %249 = sbr.rel (0) target = $region25
    $region24: #{tpu_custom_call.1} parent=1 // pred_region
      %s251 = ssub.s32 32, 32
      %252 = vsyncadd [#allocation3], %s251
      %s254 = sshll.u32 [#allocation2], 4
      %s255 = int_to_ptr.vmem [resolvable:$true] %s254
      %257 = dma.vmem_to_hbm [thread:$0]  %s255, 32, %s5, [#allocation3]
    $region25: #{tpu_custom_call.1} parent=1 // pred_fallthru
      _
    // Predicated region
    $region26: #{tpu_custom_call.1} parent=1 // pred_check
      _
    $region27: #{tpu_custom_call.1} parent=1 // pred_check_branch
      %259 = sbr.rel (0) target = $region29
    $region28: #{tpu_custom_call.1} parent=1 // pred_region
      %260 = dma.done [#allocation3], 32
    $region29: #{tpu_custom_call.1} parent=1 // pred_fallthru
      _
    %261 = vsyncpa [#allocation3], 1

</llo_original>
